<compile_context>
chip_gen: v7x
topology: tpu7x:2x2x1
jax: 0.10.0
libtpu: 0.0.40
codegen_flags: <defaults>
</compile_context>

<pallas_src>
import jax
import jax.numpy as jnp
from jax import lax
from jax.experimental import pallas as pl
from jax.experimental.pallas import tpu as pltpu


def _make_kernel(n_total, tile_n, needs_mask):
    """Kernel factory: n_total / tile_n / needs_mask are static Python values."""

    def kernel(xT_ref, w0_ref, gram_ref, b0_ref, w1_ref, y_ref, g_ref):
        i = pl.program_id(0)

        @pl.when(i == 0)
        def _init():
            y_ref[...] = jnp.zeros_like(y_ref)
            g_ref[...] = jnp.zeros_like(g_ref)

        xT = xT_ref[...]                                   # (8, T)   f32, lane-dense in batch
        w0 = w0_ref[...]                                   # (16, 8)
        gram = gram_ref[...]                               # (16, 16) = W0 @ W0^T
        b0 = b0_ref[...]                                   # (16, 1)
        w1c = w1_ref[...]                                  # (16, 1)

        # Forward: hT = W0 @ xT + b0 ; tT = tanh(hT)       (16, T)
        hT = jnp.dot(w0, xT, preferred_element_type=jnp.float32) + b0
        tT = jnp.tanh(hT)

        # dL/dh (up to the 1/N factor): gh = (1 - t^2) * w1   (column-independent)
        ghT = (1.0 - tT * tT) * w1c                        # (16, T)
        yprod = tT * w1c                                   # contributes to y numerator

        if needs_mask:
            # Zero out padded batch columns (last tile only).
            col = i * tile_n + lax.broadcasted_iota(jnp.int32, tT.shape, 1)
            valid = (col < n_total).astype(jnp.float32)
            ghT = ghT * valid
            yprod = yprod * valid

        # sum(grad^2) * N^2 contribution: sum(gh * (G @ gh)) (Gram-matrix rewrite)
        gG = jnp.dot(gram, ghT, preferred_element_type=jnp.float32)   # (16, T)

        y_ref[...] = y_ref[...] + jnp.sum(yprod)
        g_ref[...] = g_ref[...] + jnp.sum(ghT * gG)

    return kernel


def double_prop_model(x, w0, b0, w1, b1, *, tile_n=16384):
    """x: (N, 8); w0: (16, 8); b0: (16,); w1: (1, 16); b1: (1,). Returns scalar."""
    x = jnp.asarray(x, jnp.float32)
    w0 = jnp.asarray(w0, jnp.float32)
    b0 = jnp.asarray(b0, jnp.float32)
    w1 = jnp.asarray(w1, jnp.float32)
    b1 = jnp.asarray(b1, jnp.float32)

    N, F = x.shape          # F == 8
    H = w0.shape[0]         # 16

    # Wrapper-side layout prep (glue, not hot-path): batch goes on the lane axis.
    xT = x.T                                # (8, N)
    gram = w0 @ w0.T                        # (16, 16)
    b0c = b0.reshape(H, 1)                  # (16, 1)
    w1c = w1.reshape(H, 1)                  # (16, 1)

    # Batch tiling: single full-extent block for small N, otherwise 128-aligned
    # tiles with zero-padding + in-kernel masking for the ragged tail.
    if N <= tile_n:
        tn = N
        n_tiles = 1
        pad = 0
    else:
        tn = tile_n
        assert tn % 128 == 0, "tile_n must be a multiple of 128"
        n_tiles = (N + tn - 1) // tn
        pad = n_tiles * tn - N
        if pad:
            xT = jnp.pad(xT, ((0, 0), (0, pad)))
    needs_mask = pad > 0

    out_y, out_g = pl.pallas_call(
        _make_kernel(N, tn, needs_mask),
        out_shape=(
            jax.ShapeDtypeStruct((1, 1), jnp.float32),   # sum(t * w1)
            jax.ShapeDtypeStruct((1, 1), jnp.float32),   # sum(gh * (G @ gh))
        ),
        grid_spec=pltpu.PrefetchScalarGridSpec(
            num_scalar_prefetch=0,
            grid=(n_tiles,),
            in_specs=[
                pl.BlockSpec((F, tn), lambda i: (0, i)),   # xT: tiled over batch (lane axis)
                pl.BlockSpec((H, F), lambda i: (0, 0)),    # W0: resident
                pl.BlockSpec((H, H), lambda i: (0, 0)),    # Gram: resident
                pl.BlockSpec((H, 1), lambda i: (0, 0)),    # b0: resident
                pl.BlockSpec((H, 1), lambda i: (0, 0)),    # w1: resident
            ],
            out_specs=[
                pl.BlockSpec((1, 1), lambda i: (0, 0)),    # resident accumulators
                pl.BlockSpec((1, 1), lambda i: (0, 0)),
            ],
        ),
        compiler_params=pltpu.CompilerParams(
            dimension_semantics=("arbitrary",),            # cross-tile accumulation
        ),
    )(xT, w0, gram, b0c, w1c)

    # Fold all scalings once, on the reduced scalars.
    n = jnp.float32(N)
    y = out_y[0, 0] / n + b1[0]
    result = out_g[0, 0] / (jnp.float32(F) * n * n * n) + y
    return result


def _reference(x, w0, b0, w1, b1):
    """Pure-JAX reference using jax.grad (mirrors torch.autograd.grad)."""
    def mlp_mean(xx):
        h = jnp.tanh(xx @ w0.T + b0)
        return jnp.mean(h @ w1.T + b1)

    y = mlp_mean(x)
    g = jax.grad(mlp_mean)(x)
    return jnp.mean(g ** 2) + y


if __name__ == "__main__":
    key = jax.random.PRNGKey(0)
    kx, k0w, k0b, k1w, k1b, kx2 = jax.random.split(key, 6)

    N = 8  # small batch consistent with the module's Linear(8,16)->Tanh->Linear(16,1)
    x = jax.random.normal(kx, (N, 8), dtype=jnp.float32)

    # Deterministic parameter init (PyTorch-Linear-style uniform bounds).
    bound0 = 1.0 / jnp.sqrt(8.0)
    w0 = jax.random.uniform(k0w, (16, 8), jnp.float32, -bound0, bound0)
    b0 = jax.random.uniform(k0b, (16,), jnp.float32, -bound0, bound0)
    bound1 = 1.0 / jnp.sqrt(16.0)
    w1 = jax.random.uniform(k1w, (1, 16), jnp.float32, -bound1, bound1)
    b1 = jax.random.uniform(k1b, (1,), jnp.float32, -bound1, bound1)

    result = jax.block_until_ready(double_prop_model(x, w0, b0, w1, b1))
    ref = _reference(x, w0, b0, w1, b1)
    assert jnp.allclose(result, ref, rtol=1e-5, atol=1e-5), (result, ref)

    # Also exercise the tiled multi-block path with a ragged tail (mask branch).
    N2 = 300
    x2 = jax.random.normal(kx2, (N2, 8), dtype=jnp.float32)
    result2 = jax.block_until_ready(
        double_prop_model(x2, w0, b0, w1, b1, tile_n=256))
    ref2 = _reference(x2, w0, b0, w1, b1)
    assert jnp.allclose(result2, ref2, rtol=1e-5, atol=1e-5), (result2, ref2)

    print("KERNEL_OK")
</pallas_src>

<mosaic_0001>
module attributes {stable_mosaic.version = 11 : i64} {
  func.func @kernel(%arg0: i32, %arg1: memref<8x8xf32, #tpu.memory_space<vmem>>, %arg2: memref<16x8xf32, #tpu.memory_space<vmem>>, %arg3: memref<16x16xf32, #tpu.memory_space<vmem>>, %arg4: memref<16x1xf32, #tpu.memory_space<vmem>>, %arg5: memref<16x1xf32, #tpu.memory_space<vmem>>, %arg6: memref<1x1xf32, #tpu.memory_space<vmem>>, %arg7: memref<1x1xf32, #tpu.memory_space<vmem>>) attributes {dimension_semantics = [#tpu.dimension_semantics<arbitrary>], iteration_bounds = array<i64: 1>, scalar_prefetch = 0 : i64, scratch_operands = 0 : i64, tpu.core_type = #tpu.core_type<tc>, window_params = [{transform_indices = @transform_0, window_bounds = array<i64: 8, 8>}, {pipeline_mode = #tpu.pipeline_mode<synchronous>, transform_indices = @transform_1, window_bounds = array<i64: 16, 8>}, {pipeline_mode = #tpu.pipeline_mode<synchronous>, transform_indices = @transform_2, window_bounds = array<i64: 16, 16>}, {pipeline_mode = #tpu.pipeline_mode<synchronous>, transform_indices = @transform_3, window_bounds = array<i64: 16, 1>}, {pipeline_mode = #tpu.pipeline_mode<synchronous>, transform_indices = @transform_4, window_bounds = array<i64: 16, 1>}, {pipeline_mode = #tpu.pipeline_mode<synchronous>, transform_indices = @transform_5, window_bounds = array<i64: 1, 1>}, {pipeline_mode = #tpu.pipeline_mode<synchronous>, transform_indices = @transform_6, window_bounds = array<i64: 1, 1>}]} {
    %c0_i32 = arith.constant 0 : i32
    %0 = arith.cmpi eq, %arg0, %c0_i32 : i32
    %1 = arith.extui %0 : i1 to i32
    %c0_i32_0 = arith.constant 0 : i32
    %2 = arith.cmpi ne, %1, %c0_i32_0 : i32
    scf.if %2 {
      %cst_22 = arith.constant 0.000000e+00 : f32
      %37 = vector.broadcast %cst_22 : f32 to vector<1x1xf32>
      %c0_23 = arith.constant 0 : index
      %c0_24 = arith.constant 0 : index
      %38 = vector.load %arg6[%c0_23, %c0_24] : memref<1x1xf32, #tpu.memory_space<vmem>>, vector<1x1xf32>
      tpu.vector_store %arg6[%c0_23, %c0_24], %37 {strides = array<i32>} : memref<1x1xf32, #tpu.memory_space<vmem>>, vector<1x1xf32>,
      %cst_25 = arith.constant 0.000000e+00 : f32
      %39 = vector.broadcast %cst_25 : f32 to vector<1x1xf32>
      %c0_26 = arith.constant 0 : index
      %c0_27 = arith.constant 0 : index
      %40 = vector.load %arg7[%c0_26, %c0_27] : memref<1x1xf32, #tpu.memory_space<vmem>>, vector<1x1xf32>
      tpu.vector_store %arg7[%c0_26, %c0_27], %39 {strides = array<i32>} : memref<1x1xf32, #tpu.memory_space<vmem>>, vector<1x1xf32>,
    } else {
    }
    %c0 = arith.constant 0 : index
    %c0_1 = arith.constant 0 : index
    %3 = vector.load %arg1[%c0, %c0_1] : memref<8x8xf32, #tpu.memory_space<vmem>>, vector<8x8xf32>
    %c0_2 = arith.constant 0 : index
    %c0_3 = arith.constant 0 : index
    %4 = vector.load %arg2[%c0_2, %c0_3] : memref<16x8xf32, #tpu.memory_space<vmem>>, vector<16x8xf32>
    %c0_4 = arith.constant 0 : index
    %c0_5 = arith.constant 0 : index
    %5 = vector.load %arg3[%c0_4, %c0_5] : memref<16x16xf32, #tpu.memory_space<vmem>>, vector<16x16xf32>
    %c0_6 = arith.constant 0 : index
    %c0_7 = arith.constant 0 : index
    %6 = vector.load %arg4[%c0_6, %c0_7] : memref<16x1xf32, #tpu.memory_space<vmem>>, vector<16x1xf32>
    %c0_8 = arith.constant 0 : index
    %c0_9 = arith.constant 0 : index
    %7 = vector.load %arg5[%c0_8, %c0_9] : memref<16x1xf32, #tpu.memory_space<vmem>>, vector<16x1xf32>
    %cst = arith.constant dense<0.000000e+00> : vector<16x8xf32>
    %8 = tpu.matmul %4, %3, %cst {dimension_numbers = #tpu.dot_dimension_numbers<[1], [0], [0], [1], [0, 0, 1, 1], [], []>} : vector<16x8xf32>, vector<8x8xf32>, vector<16x8xf32> -> vector<16x8xf32>
    %9 = vector.broadcast %6 : vector<16x1xf32> to vector<16x8xf32>
    %10 = arith.addf %8, %9 : vector<16x8xf32>
    %11 = math.tanh %10 : vector<16x8xf32>
    %12 = arith.mulf %11, %11 : vector<16x8xf32>
    %cst_10 = arith.constant 1.000000e+00 : f32
    %13 = vector.broadcast %cst_10 : f32 to vector<16x8xf32>
    %14 = arith.subf %13, %12 : vector<16x8xf32>
    %15 = vector.broadcast %7 : vector<16x1xf32> to vector<16x8xf32>
    %16 = arith.mulf %14, %15 : vector<16x8xf32>
    %17 = vector.broadcast %7 : vector<16x1xf32> to vector<16x8xf32>
    %18 = arith.mulf %11, %17 : vector<16x8xf32>
    %cst_11 = arith.constant dense<0.000000e+00> : vector<16x8xf32>
    %19 = tpu.matmul %5, %16, %cst_11 {dimension_numbers = #tpu.dot_dimension_numbers<[1], [0], [0], [1], [0, 0, 1, 1], [], []>} : vector<16x16xf32>, vector<16x8xf32>, vector<16x8xf32> -> vector<16x8xf32>
    %c0_12 = arith.constant 0 : index
    %c0_13 = arith.constant 0 : index
    %20 = vector.load %arg6[%c0_12, %c0_13] : memref<1x1xf32, #tpu.memory_space<vmem>>, vector<1x1xf32>
    %21 = vector.shape_cast %18 : vector<16x8xf32> to vector<1x16x8xf32>
    %cst_14 = arith.constant dense<0.000000e+00> : vector<1xf32>
    %22 = vector.multi_reduction <add>, %21, %cst_14 [1, 2] : vector<1x16x8xf32> to vector<1xf32>
    %23 = vector.shape_cast %22 : vector<1xf32> to vector<1x1x1xf32>
    %24 = vector.extract %23[0, 0, 0] : f32 from vector<1x1x1xf32>
    %25 = vector.broadcast %24 : f32 to vector<1x1xf32>
    %26 = arith.addf %20, %25 : vector<1x1xf32>
    %c0_15 = arith.constant 0 : index
    %c0_16 = arith.constant 0 : index
    %27 = vector.load %arg6[%c0_15, %c0_16] : memref<1x1xf32, #tpu.memory_space<vmem>>, vector<1x1xf32>
    tpu.vector_store %arg6[%c0_15, %c0_16], %26 {strides = array<i32>} : memref<1x1xf32, #tpu.memory_space<vmem>>, vector<1x1xf32>,
    %c0_17 = arith.constant 0 : index
    %c0_18 = arith.constant 0 : index
    %28 = vector.load %arg7[%c0_17, %c0_18] : memref<1x1xf32, #tpu.memory_space<vmem>>, vector<1x1xf32>
    %29 = arith.mulf %16, %19 : vector<16x8xf32>
    %30 = vector.shape_cast %29 : vector<16x8xf32> to vector<1x16x8xf32>
    %cst_19 = arith.constant dense<0.000000e+00> : vector<1xf32>
    %31 = vector.multi_reduction <add>, %30, %cst_19 [1, 2] : vector<1x16x8xf32> to vector<1xf32>
    %32 = vector.shape_cast %31 : vector<1xf32> to vector<1x1x1xf32>
    %33 = vector.extract %32[0, 0, 0] : f32 from vector<1x1x1xf32>
    %34 = vector.broadcast %33 : f32 to vector<1x1xf32>
    %35 = arith.addf %28, %34 : vector<1x1xf32>
    %c0_20 = arith.constant 0 : index
    %c0_21 = arith.constant 0 : index
    %36 = vector.load %arg7[%c0_20, %c0_21] : memref<1x1xf32, #tpu.memory_space<vmem>>, vector<1x1xf32>
    tpu.vector_store %arg7[%c0_20, %c0_21], %35 {strides = array<i32>} : memref<1x1xf32, #tpu.memory_space<vmem>>, vector<1x1xf32>,
    return
  }
  func.func @transform_0(%arg0: i32) -> (i32, i32) {
    %c0_i32 = arith.constant 0 : i32
    %c0_i32_0 = arith.constant 0 : i32
    return %c0_i32, %arg0 : i32, i32
  }
  func.func @transform_1(%arg0: i32) -> (i32, i32) {
    %c0_i32 = arith.constant 0 : i32
    %c0_i32_0 = arith.constant 0 : i32
    %c0_i32_1 = arith.constant 0 : i32
    return %c0_i32, %c0_i32_0 : i32, i32
  }
  func.func @transform_2(%arg0: i32) -> (i32, i32) {
    %c0_i32 = arith.constant 0 : i32
    %c0_i32_0 = arith.constant 0 : i32
    %c0_i32_1 = arith.constant 0 : i32
    return %c0_i32, %c0_i32_0 : i32, i32
  }
  func.func @transform_3(%arg0: i32) -> (i32, i32) {
    %c0_i32 = arith.constant 0 : i32
    %c0_i32_0 = arith.constant 0 : i32
    %c0_i32_1 = arith.constant 0 : i32
    return %c0_i32, %c0_i32_0 : i32, i32
  }
  func.func @transform_4(%arg0: i32) -> (i32, i32) {
    %c0_i32 = arith.constant 0 : i32
    %c0_i32_0 = arith.constant 0 : i32
    %c0_i32_1 = arith.constant 0 : i32
    return %c0_i32, %c0_i32_0 : i32, i32
  }
  func.func @transform_5(%arg0: i32) -> (i32, i32) {
    %c0_i32 = arith.constant 0 : i32
    %c0_i32_0 = arith.constant 0 : i32
    %c0_i32_1 = arith.constant 0 : i32
    return %c0_i32, %c0_i32_0 : i32, i32
  }
  func.func @transform_6(%arg0: i32) -> (i32, i32) {
    %c0_i32 = arith.constant 0 : i32
    %c0_i32_0 = arith.constant 0 : i32
    %c0_i32_1 = arith.constant 0 : i32
    return %c0_i32, %c0_i32_0 : i32, i32
  }
}

</mosaic_0001>

<llo_original>
// kernel: tpu_custom_call.1
$region0: #{tpu_custom_call.1}
  #allocation0 [shape = 'u32[]', space=smem, size = 0x4, offset = 0x4, fixed_abs, tag = 'smem constant byte address 0x4 - core index']
  #allocation1 [shape = 'u32[144,128]{1,0:T(1,128)}', space=vmem, size = 0x12000, scoped, tag = 'internal scratch']
  %s0 = inlined_call_operand.vmem [shape: f32[8,8], index: 0, kind: input, shape index: {}]
  %s1 = inlined_call_operand.vmem [shape: f32[16,8], index: 1, kind: input, shape index: {}]
  %s2 = inlined_call_operand.vmem [shape: f32[16,16], index: 2, kind: input, shape index: {}]
  %s3 = inlined_call_operand.vmem [shape: f32[16,1], index: 3, kind: input, shape index: {}]
  %s4 = inlined_call_operand.vmem [shape: f32[16,1], index: 4, kind: input, shape index: {}]
  %s5 = inlined_call_operand.hbm [shape: f32[1,1], index: 5, kind: output, shape index: {0}]
  %s6 = inlined_call_operand.hbm [shape: f32[1,1], index: 6, kind: output, shape index: {1}]
  %7 = xla_tuple %s5, %s6
  %s8 = sld [smem:[#allocation0]]
  $region42: #{tpu_custom_call.1} parent=0
    _
  %s10 = ssub.s32 1, %s8
  %s11 = scalar_select 0, %s10, %s8
  $region1: #{tpu_custom_call.1} parent=0
    #allocation2 [shape = 'u8[512]{0}', space=vmem, size = 0x400, scoped, tag = 'output window, operand 0, single buffered']
    #allocation3 [shape = 's32[1]{0}', space=sflag, size = 0x4, scoped, tag = 'scoped memory for tpu_custom_call.1']
    #allocation4 [shape = 'u8[512]{0}', space=vmem, size = 0x400, scoped, tag = 'output window, operand 1, single buffered']
    #allocation5 [shape = 's32[1]{0}', space=sflag, size = 0x4, scoped, tag = 'scoped memory for tpu_custom_call.1']
    %12 = vsyncpa [#allocation3], 0
    %13 = vsyncpa [#allocation5], 0
    // Predicated region
    $region2: #{tpu_custom_call.1} parent=1 // pred_check
      _
    $region3: #{tpu_custom_call.1} parent=1 // pred_check_branch
      %15 = sbr.rel (0) target = $region5
    $region4: #{tpu_custom_call.1} parent=1 // pred_region
      _
    $region5: #{tpu_custom_call.1} parent=1 // pred_fallthru
      _
    // Predicated region
    $region6: #{tpu_custom_call.1} parent=1 // pred_check
      _
    $region7: #{tpu_custom_call.1} parent=1 // pred_check_branch
      %17 = sbr.rel (0) target = $region9
    $region8: #{tpu_custom_call.1} parent=1 // pred_region
      _
    $region9: #{tpu_custom_call.1} parent=1 // pred_fallthru
      _
    // Predicated region
    $region10: #{tpu_custom_call.1} parent=1 // pred_check
      _
    $region11: #{tpu_custom_call.1} parent=1 // pred_check_branch
      %19 = sbr.rel (0) target = $region13
    $region12: #{tpu_custom_call.1} parent=1 // pred_region
      _
    $region13: #{tpu_custom_call.1} parent=1 // pred_fallthru
      _
    // Predicated region
    $region14: #{tpu_custom_call.1} parent=1 // pred_check
      _
    $region15: #{tpu_custom_call.1} parent=1 // pred_check_branch
      %21 = sbr.rel (0) target = $region17
    $region16: #{tpu_custom_call.1} parent=1 // pred_region
      _
    $region17: #{tpu_custom_call.1} parent=1 // pred_fallthru
      _
    // Predicated region
    $region18: #{tpu_custom_call.1} parent=1 // pred_check
      _
    $region19: #{tpu_custom_call.1} parent=1 // pred_check_branch
      %23 = sbr.rel (0) target = $region21
    $region20: #{tpu_custom_call.1} parent=1 // pred_region
      _
    $region21: #{tpu_custom_call.1} parent=1 // pred_fallthru
      _
    %p24 = scmp.eq.s32.totalorder 0, 0
    // Predicated region
    $region22: #{tpu_custom_call.1} parent=1 // pred_check
      %p25 = pneg %p24
    $region23: #{tpu_custom_call.1} parent=1 // pred_check_branch
      %27 = sbr.rel (%p25) target = $region25
    $region24: #{tpu_custom_call.1} parent=1 // pred_region
      %vm28 = vcmask 0
      %29 = vst.msk [vmem:[#allocation2] sm:$0x1] %vm28, 0.0
      %30 = vst.msk [vmem:[#allocation4] sm:$0x1] %vm28, 0.0
    $region25: #{tpu_custom_call.1} parent=1 // pred_fallthru
      _
    %v31 = vld [vmem:[%s0] sm:$0xff]
    %v32 = vld [vmem:[%s1] sm:$0xff]
    %v33 = vld [vmem:[%s1 + $0x8] sm:$0xff]
    %v34 = vld [vmem:[%s2] sm:$0xff]
    %v35 = vld [vmem:[%s2 + $0x8] sm:$0xff]
    %v36 = vld [vmem:[%s3] sm:$0xff]
    %v37 = vld [vmem:[%s3 + $0x8] sm:$0xff]
    %v38 = vld [vmem:[%s4] sm:$0xff]
    %v39 = vld [vmem:[%s4 + $0x8] sm:$0xff]
    %41 = vset.pattern.permute.xlu0 0
    %42 = vperm.xlu0 %41, %v36
    %v43 = vpop.permute.xlu0 %42
    %46 = vset.pattern.permute.xlu0 0
    %47 = vperm.xlu0 %46, %v37
    %v48 = vpop.permute.xlu0 %47
    %vm50 = vcmask 64512
    %v52 = vsel %vm50, %v32, 0
    %v55 = vsel %vm50, %v33, 0
    %57 = vmatprep.subr.mxu0 0.0
    %58 = vmatpush1.msra.mxu0 %v31
    %59 = vmatprep.subr.mxu0 0.0
    %60 = vmatpush1.msra.mxu0 0.0
    %61 = vmatprep.subr.mxu0 0.0
    %62 = vmatpush1.msra.mxu0 0.0
    %63 = vmatprep.subr.mxu0 0.0
    %64 = vmatpush1.msra.mxu0 0.0
    %65 = vmatprep.subr.mxu0 0.0
    %66 = vmatpush1.msra.mxu0 0.0
    %67 = vmatprep.subr.mxu0 0.0
    %68 = vmatpush1.msra.mxu0 0.0
    %69 = vmatprep.subr.mxu0 0.0
    %70 = vmatpush1.msra.mxu0 0.0
    %71 = vmatprep.subr.mxu0 0.0
    %72 = vmatpush1.msra.mxu0 0.0
    %73 = vmatprep.subr.mxu0 0.0
    %74 = vmatpush1.msra.mxu0 0.0
    %75 = vmatprep.subr.mxu0 0.0
    %76 = vmatpush1.msra.mxu0 0.0
    %77 = vmatprep.subr.mxu0 0.0
    %78 = vmatpush1.msra.mxu0 0.0
    %79 = vmatprep.subr.mxu0 0.0
    %80 = vmatpush1.msra.mxu0 0.0
    %81 = vmatprep.subr.mxu0 0.0
    %82 = vmatpush1.msra.mxu0 0.0
    %83 = vmatprep.subr.mxu0 0.0
    %84 = vmatpush1.msra.mxu0 0.0
    %85 = vmatprep.subr.mxu0 0.0
    %86 = vmatpush1.msra.mxu0 0.0
    %87 = vmatprep.subr.mxu0 0.0
    %88 = vmatpush1.msra.mxu0 0.0
    %89 = vmatprep.subr.mxu0 0.0
    %90 = vmatpush1.msra.mxu0 0.0
    %91 = vmatprep.subr.mxu0 0.0
    %92 = vmatpush1.msra.mxu0 0.0
    %93 = vmatprep.subr.mxu0 0.0
    %94 = vmatpush1.msra.mxu0 0.0
    %95 = vmatprep.subr.mxu0 0.0
    %96 = vmatpush1.msra.mxu0 0.0
    %97 = vmatprep.subr.mxu0 0.0
    %98 = vmatpush1.msra.mxu0 0.0
    %99 = vmatprep.subr.mxu0 0.0
    %100 = vmatpush1.msra.mxu0 0.0
    %101 = vmatprep.subr.mxu0 0.0
    %102 = vmatpush1.msra.mxu0 0.0
    %103 = vmatprep.subr.mxu0 0.0
    %104 = vmatpush1.msra.mxu0 0.0
    %105 = vmatprep.subr.mxu0 0.0
    %106 = vmatpush1.msra.mxu0 0.0
    %107 = vmatprep.subr.mxu0 0.0
    %108 = vmatpush1.msra.mxu0 0.0
    %109 = vmatprep.subr.mxu0 0.0
    %110 = vmatpush1.msra.mxu0 0.0
    %111 = vmatprep.subr.mxu0 0.0
    %112 = vmatpush1.msra.mxu0 0.0
    %113 = vmatprep.subr.mxu0 0.0
    %114 = vmatpush1.msra.mxu0 0.0
    %115 = vmatprep.subr.mxu0 0.0
    %116 = vmatpush1.msra.mxu0 0.0
    %117 = vmatprep.subr.mxu0 0.0
    %118 = vmatpush1.msra.mxu0 0.0
    %119 = vmatprep.subr.mxu0 0.0
    %120 = vmatpush1.msra.mxu0 0.0
    %121 = vmatprep.mubr.f32.mxu0 0.0
    %122 = vmatmul.mubr.f32.gmra.mrb[0].mxu0 %v52
    %v123 = vpop.f32.mrb[0].mxu0
    %v124 = vadd.f32 %v43, %v123
    %v125 = vpop.f32.mrb[0].mxu0
    %126 = vmatprep.mubr.f32.mxu0 0.0
    %127 = vmatmul.mubr.f32.gmra.mrb[0].mxu0 %v55
    %v128 = vpop.f32.mrb[0].mxu0
    %v129 = vadd.f32 %v48, %v128
    %v130 = vpop.f32.mrb[0].mxu0
    %131 = vdwg.mxu0
    %v132 = vtanh.pop %v124
    %v133 = vtanh.pop %v129
    %v134 = vmul.f32 %v132, %v132
    %v135 = vmul.f32 %v133, %v133
    %v136 = vsub.f32 1.0, %v134
    %v137 = vsub.f32 1.0, %v135
    %139 = vset.pattern.permute.xlu0 0
    %140 = vperm.xlu0 %139, %v38
    %v141 = vpop.permute.xlu0 %140
    %144 = vset.pattern.permute.xlu0 0
    %145 = vperm.xlu0 %144, %v39
    %v146 = vpop.permute.xlu0 %145
    %v148 = vmul.f32 %v136, %v141
    %v149 = vmul.f32 %v137, %v146
    %v150 = vmul.f32 %v132, %v141
    %v151 = vmul.f32 %v133, %v146
    %vm152 = vcmask 130048
    %v154 = vsel %vm152, %v34, 0
    %v157 = vsel %vm152, %v35, 0
    %159 = vmatprep.subr.mxu0 0.0
    %160 = vmatpush1.msra.mxu0 %v148
    %161 = vmatprep.subr.mxu0 0.0
    %162 = vmatpush1.msra.mxu0 %v149
    %163 = vmatprep.subr.mxu0 0.0
    %164 = vmatpush1.msra.mxu0 0.0
    %165 = vmatprep.subr.mxu0 0.0
    %166 = vmatpush1.msra.mxu0 0.0
    %167 = vmatprep.subr.mxu0 0.0
    %168 = vmatpush1.msra.mxu0 0.0
    %169 = vmatprep.subr.mxu0 0.0
    %170 = vmatpush1.msra.mxu0 0.0
    %171 = vmatprep.subr.mxu0 0.0
    %172 = vmatpush1.msra.mxu0 0.0
    %173 = vmatprep.subr.mxu0 0.0
    %174 = vmatpush1.msra.mxu0 0.0
    %175 = vmatprep.subr.mxu0 0.0
    %176 = vmatpush1.msra.mxu0 0.0
    %177 = vmatprep.subr.mxu0 0.0
    %178 = vmatpush1.msra.mxu0 0.0
    %179 = vmatprep.subr.mxu0 0.0
    %180 = vmatpush1.msra.mxu0 0.0
    %181 = vmatprep.subr.mxu0 0.0
    %182 = vmatpush1.msra.mxu0 0.0
    %183 = vmatprep.subr.mxu0 0.0
    %184 = vmatpush1.msra.mxu0 0.0
    %185 = vmatprep.subr.mxu0 0.0
    %186 = vmatpush1.msra.mxu0 0.0
    %187 = vmatprep.subr.mxu0 0.0
    %188 = vmatpush1.msra.mxu0 0.0
    %189 = vmatprep.subr.mxu0 0.0
    %190 = vmatpush1.msra.mxu0 0.0
    %191 = vmatprep.subr.mxu0 0.0
    %192 = vmatpush1.msra.mxu0 0.0
    %193 = vmatprep.subr.mxu0 0.0
    %194 = vmatpush1.msra.mxu0 0.0
    %195 = vmatprep.subr.mxu0 0.0
    %196 = vmatpush1.msra.mxu0 0.0
    %197 = vmatprep.subr.mxu0 0.0
    %198 = vmatpush1.msra.mxu0 0.0
    %199 = vmatprep.subr.mxu0 0.0
    %200 = vmatpush1.msra.mxu0 0.0
    %201 = vmatprep.subr.mxu0 0.0
    %202 = vmatpush1.msra.mxu0 0.0
    %203 = vmatprep.subr.mxu0 0.0
    %204 = vmatpush1.msra.mxu0 0.0
    %205 = vmatprep.subr.mxu0 0.0
    %206 = vmatpush1.msra.mxu0 0.0
    %207 = vmatprep.subr.mxu0 0.0
    %208 = vmatpush1.msra.mxu0 0.0
    %209 = vmatprep.subr.mxu0 0.0
    %210 = vmatpush1.msra.mxu0 0.0
    %211 = vmatprep.subr.mxu0 0.0
    %212 = vmatpush1.msra.mxu0 0.0
    %213 = vmatprep.subr.mxu0 0.0
    %214 = vmatpush1.msra.mxu0 0.0
    %215 = vmatprep.subr.mxu0 0.0
    %216 = vmatpush1.msra.mxu0 0.0
    %217 = vmatprep.subr.mxu0 0.0
    %218 = vmatpush1.msra.mxu0 0.0
    %219 = vmatprep.subr.mxu0 0.0
    %220 = vmatpush1.msra.mxu0 0.0
    %221 = vmatprep.subr.mxu0 0.0
    %222 = vmatpush1.msra.mxu0 0.0
    %223 = vmatprep.mubr.f32.mxu0 0.0
    %224 = vmatmul.mubr.f32.gmra.mrb[0].mxu0 %v154
    %v225 = vpop.f32.mrb[0].mxu0
    %v226 = vadd.f32 0.0, %v225
    %v227 = vpop.f32.mrb[0].mxu0
    %228 = vmatprep.mubr.f32.mxu0 0.0
    %229 = vmatmul.mubr.f32.gmra.mrb[0].mxu0 %v157
    %v230 = vpop.f32.mrb[0].mxu0
    %v231 = vadd.f32 0.0, %v230
    %v232 = vpop.f32.mrb[0].mxu0
    %233 = vdwg.mxu0
    %v234 = vld [vmem:[#allocation2] sm:$0x1]
    %v235 = vsel %vm50, %v150, 0.0
    %v236 = vsel %vm50, %v151, 0.0
    %v237 = vadd.f32 %v235, %v236
    %238 = vadd.xlane.f32.xlu0 %v237
    %v239 = vpop.xlane.xlu0 %238
    %v240 = vrot.slane %v239, 4
    %v241 = vadd.f32 %v239, %v240
    %v242 = vrot.slane %v241, 2
    %v243 = vadd.f32 %v241, %v242
    %v244 = vrot.slane %v243, 1
    %v245 = vadd.f32 %v243, %v244
    %s246 = vtos %v245
    %v247 = vstv %s246
    %v248 = vadd.f32 %v234, %v247
    %vm249 = vcmask 0
    %250 = vst.msk [vmem:[#allocation2] sm:$0x1] %vm249, %v248
    %v251 = vld [vmem:[#allocation4] sm:$0x1]
    %v252 = vmul.f32 %v148, %v226
    %v253 = vmul.f32 %v149, %v231
    %v254 = vsel %vm50, %v252, 0.0
    %v255 = vsel %vm50, %v253, 0.0
    %v256 = vadd.f32 %v254, %v255
    %257 = vadd.xlane.f32.xlu0 %v256
    %v258 = vpop.xlane.xlu0 %257
    %v259 = vrot.slane %v258, 4
    %v260 = vadd.f32 %v258, %v259
    %v261 = vrot.slane %v260, 2
    %v262 = vadd.f32 %v260, %v261
    %v263 = vrot.slane %v262, 1
    %v264 = vadd.f32 %v262, %v263
    %s265 = vtos %v264
    %v266 = vstv %s265
    %v267 = vadd.f32 %v251, %v266
    %268 = vst.msk [vmem:[#allocation4] sm:$0x1] %vm249, %v267
    // Predicated region
    $region26: #{tpu_custom_call.1} parent=1 // pred_check
      _
    $region27: #{tpu_custom_call.1} parent=1 // pred_check_branch
      %270 = sbr.rel (0) target = $region29
    $region28: #{tpu_custom_call.1} parent=1 // pred_region
      %s272 = ssub.s32 16, 16
      %273 = vsyncadd [#allocation3], %s272
      %s275 = sshll.u32 [#allocation2], 4
      %s276 = int_to_ptr.vmem [resolvable:$true] %s275
      %278 = dma.vmem_to_hbm [thread:$0]  %s276, 16, %s5, [#allocation3]
    $region29: #{tpu_custom_call.1} parent=1 // pred_fallthru
      _
    // Predicated region
    $region30: #{tpu_custom_call.1} parent=1 // pred_check
      _
    $region31: #{tpu_custom_call.1} parent=1 // pred_check_branch
      %280 = sbr.rel (0) target = $region33
    $region32: #{tpu_custom_call.1} parent=1 // pred_region
      %s282 = ssub.s32 16, 16
      %283 = vsyncadd [#allocation5], %s282
      %s285 = sshll.u32 [#allocation4], 4
      %s286 = int_to_ptr.vmem [resolvable:$true] %s285
      %288 = dma.vmem_to_hbm [thread:$0]  %s286, 16, %s6, [#allocation5]
    $region33: #{tpu_custom_call.1} parent=1 // pred_fallthru
      _
    // Predicated region
    $region34: #{tpu_custom_call.1} parent=1 // pred_check
      _
    $region35: #{tpu_custom_call.1} parent=1 // pred_check_branch
      %290 = sbr.rel (0) target = $region37
    $region36: #{tpu_custom_call.1} parent=1 // pred_region
      %291 = dma.done [#allocation3], 16
    $region37: #{tpu_custom_call.1} parent=1 // pred_fallthru
      _
    // Predicated region
    $region38: #{tpu_custom_call.1} parent=1 // pred_check
      _
    $region39: #{tpu_custom_call.1} parent=1 // pred_check_branch
      %293 = sbr.rel (0) target = $region41
    $region40: #{tpu_custom_call.1} parent=1 // pred_region
      %294 = dma.done [#allocation5], 16
    $region41: #{tpu_custom_call.1} parent=1 // pred_fallthru
      _
    %295 = vsyncpa [#allocation3], 1
    %296 = vsyncpa [#allocation5], 1

</llo_original>
